<compile_context>
chip_gen: v6e
topology: v6e:2x2x1
jax: 0.10.0
libtpu: 0.0.40
codegen_flags: <defaults>
</compile_context>

<pallas_src>
import math
import functools

import jax
import jax.numpy as jnp
from jax import lax
from jax.experimental import pallas as pl
from jax.experimental.pallas import tpu as pltpu


def _cross_attention_kernel(
    key_ref,              # (bb, S_k, H)  hidden_states -> K / V
    qry_ref,              # (bb, S_q, H)  query_states  -> Q, residual
    wq_ref, bq_ref,       # (H, H), (1, H)      weights pre-transposed to (in, out)
    wkv_ref, bkv_ref,     # (H, 2H), (1, 2H)    fused [K | V]
    wo_ref, bo_ref,       # (H, H), (1, H)      output dense
    gamma_ref, beta_ref,  # (1, H)              LayerNorm params
    out_ref,              # (bb, S_q, H)
    *,
    head_size: int,
    eps: float,
):
    f32 = jnp.float32
    bb, s_q, hid = qry_ref.shape
    _, s_k, _ = key_ref.shape
    cdt = qry_ref.dtype  # MXU operand dtype (bf16 stays bf16; f32 stays f32)

    q_in = qry_ref[...]                       # (bb, S_q, H)
    k_in = key_ref[...]                       # (bb, S_k, H)
    q2 = q_in.reshape(bb * s_q, hid)          # flatten rows for batched projections
    k2 = k_in.reshape(bb * s_k, hid)

    # --- Q projection + fused K|V projection (MXU, f32 accumulation) ---
    q = jnp.dot(q2, wq_ref[...], preferred_element_type=f32) + bq_ref[...]
    kv = jnp.dot(k2, wkv_ref[...], preferred_element_type=f32) + bkv_ref[...]
    k = kv[:, :hid]
    v = kv[:, hid:]

    qh = q.astype(cdt).reshape(bb, s_q, hid)
    kh = k.astype(cdt).reshape(bb, s_k, hid)
    vh = v.astype(cdt).reshape(bb, s_k, hid)

    # --- attention scores: contract last dims directly (no explicit transpose) ---
    scores = lax.dot_general(
        qh, kh,
        dimension_numbers=(((2,), (2,)), ((0,), (0,))),
        preferred_element_type=f32,
    )                                          # (bb, S_q, S_k)
    # "attention_mask = scores*0 + 1; scores += mask" == scores + 1.0 exactly
    scores = scores * (1.0 / math.sqrt(head_size)) + 1.0

    # --- softmax over keys (f32) ---
    m = jnp.max(scores, axis=-1, keepdims=True)
    e = jnp.exp(scores - m)
    probs = e * pl.reciprocal(jnp.sum(e, axis=-1, keepdims=True), approx=True)
    # attention-prob dropout: identity at inference

    # --- context ---
    ctx = lax.dot_general(
        probs.astype(cdt), vh,
        dimension_numbers=(((2,), (1,)), ((0,), (0,))),
        preferred_element_type=f32,
    )                                          # (bb, S_q, H)

    # --- BertSelfOutput: dense + residual + LayerNorm (f32) ---
    ctx2 = ctx.astype(cdt).reshape(bb * s_q, hid)
    dense = jnp.dot(ctx2, wo_ref[...], preferred_element_type=f32) + bo_ref[...]
    # hidden dropout: identity at inference
    resid = dense + q2.astype(f32)             # residual is query_tensor

    mean = jnp.mean(resid, axis=-1, keepdims=True)
    xc = resid - mean
    var = jnp.mean(xc * xc, axis=-1, keepdims=True)
    normed = xc * lax.rsqrt(var + eps)
    out = normed * gamma_ref[...] + beta_ref[...]

    out_ref[...] = out.reshape(bb, s_q, hid).astype(out_ref.dtype)


def _pick_batch_block(B: int, S_q: int, target_rows: int = 256) -> int:
    """Largest divisor of B such that bb*S_q <= target_rows, but keep >=2 grid
    steps (when B >= 2) so the 'parallel' grid axis can use both v7x TensorCores."""
    divisors = [d for d in range(1, B + 1) if B % d == 0]
    cand = [d for d in divisors if d * S_q <= target_rows]
    bb = max(cand) if cand else 1
    if B >= 2 and B // bb < 2:
        smaller = [d for d in divisors if d <= B // 2]
        if smaller:
            bb = max(smaller)
    return bb


def cross_attention(
    key_tensor,    # (B, S_k, H)
    query_tensor,  # (B, S_q, H)
    params,        # dict of weights (PyTorch nn.Linear layout: (out, in))
    *,
    num_attention_heads: int = 1,
    eps: float = 1e-12,
):
    B, S_k, H = key_tensor.shape
    _, S_q, _ = query_tensor.shape
    assert H % num_attention_heads == 0
    assert num_attention_heads == 1, "kernel implements the module default (1 head)"
    head_size = H // num_attention_heads

    bb = _pick_batch_block(B, S_q)
    grid = (B // bb,)

    # Pre-transpose nn.Linear weights (out, in) -> (in, out); fuse K|V.
    wq = params["wq"].T
    wkv = jnp.concatenate([params["wk"].T, params["wv"].T], axis=1)      # (H, 2H)
    wo = params["wo"].T
    bq = params["bq"].reshape(1, H)
    bkv = jnp.concatenate([params["bk"], params["bv"]]).reshape(1, 2 * H)
    bo = params["bo"].reshape(1, H)
    gamma = params["gamma"].reshape(1, H)
    beta = params["beta"].reshape(1, H)

    def const2d(shape):  # grid-invariant weights/biases (never re-DMA'd)
        return pl.BlockSpec(shape, lambda i: (0, 0))

    kernel = functools.partial(_cross_attention_kernel, head_size=head_size, eps=eps)

    return pl.pallas_call(
        kernel,
        out_shape=jax.ShapeDtypeStruct((B, S_q, H), query_tensor.dtype),
        grid=grid,
        in_specs=[
            pl.BlockSpec((bb, S_k, H), lambda i: (i, 0, 0)),
            pl.BlockSpec((bb, S_q, H), lambda i: (i, 0, 0)),
            const2d((H, H)), const2d((1, H)),           # Q
            const2d((H, 2 * H)), const2d((1, 2 * H)),   # fused K|V
            const2d((H, H)), const2d((1, H)),           # output dense
            const2d((1, H)), const2d((1, H)),           # LayerNorm gamma / beta
        ],
        out_specs=pl.BlockSpec((bb, S_q, H), lambda i: (i, 0, 0)),
        compiler_params=pltpu.CompilerParams(
            dimension_semantics=("parallel",),
            vmem_limit_bytes=64 * 1024 * 1024,
        ),
    )(key_tensor, query_tensor, wq, bq, wkv, bkv, wo, bo, gamma, beta)


def _reference(key_tensor, query_tensor, params, eps=1e-12):
    """Pure-JAX reference mirroring the PyTorch module (1 head, eval mode)."""
    H = key_tensor.shape[-1]
    q = query_tensor @ params["wq"].T + params["bq"]
    k = key_tensor @ params["wk"].T + params["bk"]
    v = key_tensor @ params["wv"].T + params["bv"]
    scores = jnp.einsum("bqd,bkd->bqk", q, k) / math.sqrt(H)
    scores = scores + (scores * 0 + 1)
    probs = jax.nn.softmax(scores, axis=-1)
    ctx = jnp.einsum("bqk,bkd->bqd", probs, v)
    dense = ctx @ params["wo"].T + params["bo"]
    resid = dense + query_tensor
    mean = resid.mean(-1, keepdims=True)
    var = ((resid - mean) ** 2).mean(-1, keepdims=True)
    return (resid - mean) / jnp.sqrt(var + eps) * params["gamma"] + params["beta"]


if __name__ == "__main__":
    B, S_Q, S_K, H = 2, 8, 16, 32

    key = jax.random.PRNGKey(0)
    keys = jax.random.split(key, 12)
    scale = 0.02

    params = {
        "wq": scale * jax.random.normal(keys[0], (H, H), jnp.float32),
        "bq": scale * jax.random.normal(keys[1], (H,), jnp.float32),
        "wk": scale * jax.random.normal(keys[2], (H, H), jnp.float32),
        "bk": scale * jax.random.normal(keys[3], (H,), jnp.float32),
        "wv": scale * jax.random.normal(keys[4], (H, H), jnp.float32),
        "bv": scale * jax.random.normal(keys[5], (H,), jnp.float32),
        "wo": scale * jax.random.normal(keys[6], (H, H), jnp.float32),
        "bo": scale * jax.random.normal(keys[7], (H,), jnp.float32),
        "gamma": jnp.ones((H,), jnp.float32),
        "beta": jnp.zeros((H,), jnp.float32),
    }

    key_tensor = jax.random.normal(keys[8], (B, S_K, H), jnp.float32)
    query_tensor = jax.random.normal(keys[9], (B, S_Q, H), jnp.float32)

    out = cross_attention(key_tensor, query_tensor, params)
    out = jax.block_until_ready(out)

    ref = _reference(key_tensor, query_tensor, params)
    assert out.shape == (B, S_Q, H)
    # tolerance loosened slightly for the approx (EUP) reciprocal in the softmax
    assert jnp.allclose(out, ref, atol=1e-3, rtol=1e-3), "mismatch vs reference"

    print("KERNEL_OK")
</pallas_src>

<mosaic_0001>
module attributes {stable_mosaic.version = 11 : i64} {
  func.func @_cross_attention_kernel(%arg0: i32, %arg1: memref<1x16x32xf32, #tpu.memory_space<vmem>>, %arg2: memref<1x8x32xf32, #tpu.memory_space<vmem>>, %arg3: memref<32x32xf32, #tpu.memory_space<vmem>>, %arg4: memref<1x32xf32, #tpu.memory_space<vmem>>, %arg5: memref<32x64xf32, #tpu.memory_space<vmem>>, %arg6: memref<1x64xf32, #tpu.memory_space<vmem>>, %arg7: memref<32x32xf32, #tpu.memory_space<vmem>>, %arg8: memref<1x32xf32, #tpu.memory_space<vmem>>, %arg9: memref<1x32xf32, #tpu.memory_space<vmem>>, %arg10: memref<1x32xf32, #tpu.memory_space<vmem>>, %arg11: memref<1x8x32xf32, #tpu.memory_space<vmem>>) attributes {dimension_semantics = [#tpu.dimension_semantics<parallel>], iteration_bounds = array<i64: 2>, scalar_prefetch = 0 : i64, scratch_operands = 0 : i64, tpu.core_type = #tpu.core_type<tc>, window_params = [{transform_indices = @transform_0, window_bounds = array<i64: 1, 16, 32>}, {transform_indices = @transform_1, window_bounds = array<i64: 1, 8, 32>}, {pipeline_mode = #tpu.pipeline_mode<synchronous>, transform_indices = @transform_2, window_bounds = array<i64: 32, 32>}, {pipeline_mode = #tpu.pipeline_mode<synchronous>, transform_indices = @transform_3, window_bounds = array<i64: 1, 32>}, {pipeline_mode = #tpu.pipeline_mode<synchronous>, transform_indices = @transform_4, window_bounds = array<i64: 32, 64>}, {pipeline_mode = #tpu.pipeline_mode<synchronous>, transform_indices = @transform_5, window_bounds = array<i64: 1, 64>}, {pipeline_mode = #tpu.pipeline_mode<synchronous>, transform_indices = @transform_6, window_bounds = array<i64: 32, 32>}, {pipeline_mode = #tpu.pipeline_mode<synchronous>, transform_indices = @transform_7, window_bounds = array<i64: 1, 32>}, {pipeline_mode = #tpu.pipeline_mode<synchronous>, transform_indices = @transform_8, window_bounds = array<i64: 1, 32>}, {pipeline_mode = #tpu.pipeline_mode<synchronous>, transform_indices = @transform_9, window_bounds = array<i64: 1, 32>}, {transform_indices = @transform_10, window_bounds = array<i64: 1, 8, 32>}]} {
    %c0 = arith.constant 0 : index
    %c0_0 = arith.constant 0 : index
    %c0_1 = arith.constant 0 : index
    %0 = vector.load %arg2[%c0, %c0_0, %c0_1] : memref<1x8x32xf32, #tpu.memory_space<vmem>>, vector<1x8x32xf32>
    %c0_2 = arith.constant 0 : index
    %c0_3 = arith.constant 0 : index
    %c0_4 = arith.constant 0 : index
    %1 = vector.load %arg1[%c0_2, %c0_3, %c0_4] : memref<1x16x32xf32, #tpu.memory_space<vmem>>, vector<1x16x32xf32>
    %2 = vector.shape_cast %0 : vector<1x8x32xf32> to vector<8x32xf32>
    %3 = vector.shape_cast %1 : vector<1x16x32xf32> to vector<16x32xf32>
    %c0_5 = arith.constant 0 : index
    %c0_6 = arith.constant 0 : index
    %4 = vector.load %arg3[%c0_5, %c0_6] : memref<32x32xf32, #tpu.memory_space<vmem>>, vector<32x32xf32>
    %cst = arith.constant dense<0.000000e+00> : vector<8x32xf32>
    %5 = tpu.matmul %2, %4, %cst {dimension_numbers = #tpu.dot_dimension_numbers<[1], [0], [0], [1], [0, 0, 1, 1], [], []>} : vector<8x32xf32>, vector<32x32xf32>, vector<8x32xf32> -> vector<8x32xf32>
    %c0_7 = arith.constant 0 : index
    %c0_8 = arith.constant 0 : index
    %6 = vector.load %arg4[%c0_7, %c0_8] : memref<1x32xf32, #tpu.memory_space<vmem>>, vector<1x32xf32>
    %7 = vector.broadcast %6 : vector<1x32xf32> to vector<8x32xf32>
    %8 = arith.addf %5, %7 : vector<8x32xf32>
    %c0_9 = arith.constant 0 : index
    %c0_10 = arith.constant 0 : index
    %9 = vector.load %arg5[%c0_9, %c0_10] : memref<32x64xf32, #tpu.memory_space<vmem>>, vector<32x64xf32>
    %cst_11 = arith.constant dense<0.000000e+00> : vector<16x64xf32>
    %10 = tpu.matmul %3, %9, %cst_11 {dimension_numbers = #tpu.dot_dimension_numbers<[1], [0], [0], [1], [0, 0, 1, 1], [], []>} : vector<16x32xf32>, vector<32x64xf32>, vector<16x64xf32> -> vector<16x64xf32>
    %c0_12 = arith.constant 0 : index
    %c0_13 = arith.constant 0 : index
    %11 = vector.load %arg6[%c0_12, %c0_13] : memref<1x64xf32, #tpu.memory_space<vmem>>, vector<1x64xf32>
    %12 = vector.broadcast %11 : vector<1x64xf32> to vector<16x64xf32>
    %13 = arith.addf %10, %12 : vector<16x64xf32>
    %14 = vector.extract_strided_slice %13 {offsets = [0, 0], sizes = [16, 32], strides = [1, 1]} : vector<16x64xf32> to vector<16x32xf32>
    %15 = vector.extract_strided_slice %13 {offsets = [0, 32], sizes = [16, 32], strides = [1, 1]} : vector<16x64xf32> to vector<16x32xf32>
    %16 = vector.shape_cast %8 : vector<8x32xf32> to vector<1x8x32xf32>
    %17 = vector.shape_cast %14 : vector<16x32xf32> to vector<1x16x32xf32>
    %18 = vector.shape_cast %15 : vector<16x32xf32> to vector<1x16x32xf32>
    %cst_14 = arith.constant dense<0.000000e+00> : vector<1x8x16xf32>
    %19 = tpu.matmul %16, %17, %cst_14 {dimension_numbers = #tpu.dot_dimension_numbers<[2], [2], [1], [1], [0, 0, 0, 1, 1, 1], [0], [0]>} : vector<1x8x32xf32>, vector<1x16x32xf32>, vector<1x8x16xf32> -> vector<1x8x16xf32>
    %cst_15 = arith.constant 0.176776692 : f32
    %20 = vector.broadcast %cst_15 : f32 to vector<1x8x16xf32>
    %21 = arith.mulf %19, %20 : vector<1x8x16xf32>
    %cst_16 = arith.constant 1.000000e+00 : f32
    %22 = vector.broadcast %cst_16 : f32 to vector<1x8x16xf32>
    %23 = arith.addf %21, %22 : vector<1x8x16xf32>
    %cst_17 = arith.constant dense<0xFF800000> : vector<1x8xf32>
    %24 = vector.multi_reduction <maximumf>, %23, %cst_17 [2] : vector<1x8x16xf32> to vector<1x8xf32>
    %25 = vector.shape_cast %24 : vector<1x8xf32> to vector<1x8x1xf32>
    %26 = vector.broadcast %25 : vector<1x8x1xf32> to vector<1x8x16xf32>
    %27 = arith.subf %23, %26 : vector<1x8x16xf32>
    %28 = math.exp %27 : vector<1x8x16xf32>
    %cst_18 = arith.constant dense<0.000000e+00> : vector<1x8xf32>
    %29 = vector.multi_reduction <add>, %28, %cst_18 [2] : vector<1x8x16xf32> to vector<1x8xf32>
    %30 = vector.shape_cast %29 : vector<1x8xf32> to vector<1x8x1xf32>
    %31 = tpu.reciprocal %30 {approx = true} : vector<1x8x1xf32> -> vector<1x8x1xf32>
    %32 = vector.broadcast %31 : vector<1x8x1xf32> to vector<1x8x16xf32>
    %33 = arith.mulf %28, %32 : vector<1x8x16xf32>
    %cst_19 = arith.constant dense<0.000000e+00> : vector<1x8x32xf32>
    %34 = tpu.matmul %33, %18, %cst_19 {dimension_numbers = #tpu.dot_dimension_numbers<[2], [1], [1], [2], [0, 0, 0, 1, 1, 2], [0], [0]>} : vector<1x8x16xf32>, vector<1x16x32xf32>, vector<1x8x32xf32> -> vector<1x8x32xf32>
    %35 = vector.shape_cast %34 : vector<1x8x32xf32> to vector<8x32xf32>
    %c0_20 = arith.constant 0 : index
    %c0_21 = arith.constant 0 : index
    %36 = vector.load %arg7[%c0_20, %c0_21] : memref<32x32xf32, #tpu.memory_space<vmem>>, vector<32x32xf32>
    %cst_22 = arith.constant dense<0.000000e+00> : vector<8x32xf32>
    %37 = tpu.matmul %35, %36, %cst_22 {dimension_numbers = #tpu.dot_dimension_numbers<[1], [0], [0], [1], [0, 0, 1, 1], [], []>} : vector<8x32xf32>, vector<32x32xf32>, vector<8x32xf32> -> vector<8x32xf32>
    %c0_23 = arith.constant 0 : index
    %c0_24 = arith.constant 0 : index
    %38 = vector.load %arg8[%c0_23, %c0_24] : memref<1x32xf32, #tpu.memory_space<vmem>>, vector<1x32xf32>
    %39 = vector.broadcast %38 : vector<1x32xf32> to vector<8x32xf32>
    %40 = arith.addf %37, %39 : vector<8x32xf32>
    %41 = arith.addf %40, %2 : vector<8x32xf32>
    %cst_25 = arith.constant dense<0.000000e+00> : vector<8xf32>
    %42 = vector.multi_reduction <add>, %41, %cst_25 [1] : vector<8x32xf32> to vector<8xf32>
    %43 = vector.shape_cast %42 : vector<8xf32> to vector<8x1xf32>
    %cst_26 = arith.constant 3.200000e+01 : f32
    %44 = vector.broadcast %cst_26 : f32 to vector<8x1xf32>
    %45 = arith.divf %43, %44 : vector<8x1xf32>
    %46 = vector.broadcast %45 : vector<8x1xf32> to vector<8x32xf32>
    %47 = arith.subf %41, %46 : vector<8x32xf32>
    %48 = arith.mulf %47, %47 : vector<8x32xf32>
    %cst_27 = arith.constant dense<0.000000e+00> : vector<8xf32>
    %49 = vector.multi_reduction <add>, %48, %cst_27 [1] : vector<8x32xf32> to vector<8xf32>
    %50 = vector.shape_cast %49 : vector<8xf32> to vector<8x1xf32>
    %cst_28 = arith.constant 3.200000e+01 : f32
    %51 = vector.broadcast %cst_28 : f32 to vector<8x1xf32>
    %52 = arith.divf %50, %51 : vector<8x1xf32>
    %cst_29 = arith.constant 9.99999996E-13 : f32
    %53 = vector.broadcast %cst_29 : f32 to vector<8x1xf32>
    %54 = arith.addf %52, %53 : vector<8x1xf32>
    %55 = math.rsqrt %54 : vector<8x1xf32>
    %56 = vector.broadcast %55 : vector<8x1xf32> to vector<8x32xf32>
    %57 = arith.mulf %47, %56 : vector<8x32xf32>
    %c0_30 = arith.constant 0 : index
    %c0_31 = arith.constant 0 : index
    %58 = vector.load %arg9[%c0_30, %c0_31] : memref<1x32xf32, #tpu.memory_space<vmem>>, vector<1x32xf32>
    %59 = vector.broadcast %58 : vector<1x32xf32> to vector<8x32xf32>
    %60 = arith.mulf %57, %59 : vector<8x32xf32>
    %c0_32 = arith.constant 0 : index
    %c0_33 = arith.constant 0 : index
    %61 = vector.load %arg10[%c0_32, %c0_33] : memref<1x32xf32, #tpu.memory_space<vmem>>, vector<1x32xf32>
    %62 = vector.broadcast %61 : vector<1x32xf32> to vector<8x32xf32>
    %63 = arith.addf %60, %62 : vector<8x32xf32>
    %64 = vector.shape_cast %63 : vector<8x32xf32> to vector<1x8x32xf32>
    %c0_34 = arith.constant 0 : index
    %c0_35 = arith.constant 0 : index
    %c0_36 = arith.constant 0 : index
    %65 = vector.load %arg11[%c0_34, %c0_35, %c0_36] : memref<1x8x32xf32, #tpu.memory_space<vmem>>, vector<1x8x32xf32>
    tpu.vector_store %arg11[%c0_34, %c0_35, %c0_36], %64 {strides = array<i32>} : memref<1x8x32xf32, #tpu.memory_space<vmem>>, vector<1x8x32xf32>,
    return
  }
  func.func @transform_0(%arg0: i32) -> (i32, i32, i32) {
    %c0_i32 = arith.constant 0 : i32
    %c0_i32_0 = arith.constant 0 : i32
    %c0_i32_1 = arith.constant 0 : i32
    return %arg0, %c0_i32, %c0_i32_0 : i32, i32, i32
  }
  func.func @transform_1(%arg0: i32) -> (i32, i32, i32) {
    %c0_i32 = arith.constant 0 : i32
    %c0_i32_0 = arith.constant 0 : i32
    %c0_i32_1 = arith.constant 0 : i32
    return %arg0, %c0_i32, %c0_i32_0 : i32, i32, i32
  }
  func.func @transform_2(%arg0: i32) -> (i32, i32) {
    %c0_i32 = arith.constant 0 : i32
    %c0_i32_0 = arith.constant 0 : i32
    %c0_i32_1 = arith.constant 0 : i32
    return %c0_i32, %c0_i32_0 : i32, i32
  }
  func.func @transform_3(%arg0: i32) -> (i32, i32) {
    %c0_i32 = arith.constant 0 : i32
    %c0_i32_0 = arith.constant 0 : i32
    %c0_i32_1 = arith.constant 0 : i32
    return %c0_i32, %c0_i32_0 : i32, i32
  }
  func.func @transform_4(%arg0: i32) -> (i32, i32) {
    %c0_i32 = arith.constant 0 : i32
    %c0_i32_0 = arith.constant 0 : i32
    %c0_i32_1 = arith.constant 0 : i32
    return %c0_i32, %c0_i32_0 : i32, i32
  }
  func.func @transform_5(%arg0: i32) -> (i32, i32) {
    %c0_i32 = arith.constant 0 : i32
    %c0_i32_0 = arith.constant 0 : i32
    %c0_i32_1 = arith.constant 0 : i32
    return %c0_i32, %c0_i32_0 : i32, i32
  }
  func.func @transform_6(%arg0: i32) -> (i32, i32) {
    %c0_i32 = arith.constant 0 : i32
    %c0_i32_0 = arith.constant 0 : i32
    %c0_i32_1 = arith.constant 0 : i32
    return %c0_i32, %c0_i32_0 : i32, i32
  }
  func.func @transform_7(%arg0: i32) -> (i32, i32) {
    %c0_i32 = arith.constant 0 : i32
    %c0_i32_0 = arith.constant 0 : i32
    %c0_i32_1 = arith.constant 0 : i32
    return %c0_i32, %c0_i32_0 : i32, i32
  }
  func.func @transform_8(%arg0: i32) -> (i32, i32) {
    %c0_i32 = arith.constant 0 : i32
    %c0_i32_0 = arith.constant 0 : i32
    %c0_i32_1 = arith.constant 0 : i32
    return %c0_i32, %c0_i32_0 : i32, i32
  }
  func.func @transform_9(%arg0: i32) -> (i32, i32) {
    %c0_i32 = arith.constant 0 : i32
    %c0_i32_0 = arith.constant 0 : i32
    %c0_i32_1 = arith.constant 0 : i32
    return %c0_i32, %c0_i32_0 : i32, i32
  }
  func.func @transform_10(%arg0: i32) -> (i32, i32, i32) {
    %c0_i32 = arith.constant 0 : i32
    %c0_i32_0 = arith.constant 0 : i32
    %c0_i32_1 = arith.constant 0 : i32
    return %arg0, %c0_i32, %c0_i32_0 : i32, i32, i32
  }
}

</mosaic_0001>

<llo_original>
// kernel: tpu_custom_call.1
$region0: #{tpu_custom_call.1}
  #allocation0 [shape = 'u32[]', space=smem, size = 0x4, offset = 0x4, fixed_abs, tag = 'smem constant byte address 0x4 - core index']
  #allocation1 [shape = 'u32[144,128]{1,0:T(1,128)}', space=vmem, size = 0x12000, scoped, tag = 'internal scratch']
  %s0 = inlined_call_operand.hbm [shape: f32[2,16,32], index: 0, kind: input, shape index: {}]
  %s1 = inlined_call_operand.hbm [shape: f32[2,8,32], index: 1, kind: input, shape index: {}]
  %s2 = inlined_call_operand.hbm [shape: f32[32,32], index: 2, kind: input, shape index: {}]
  %s3 = inlined_call_operand.vmem [shape: f32[1,32], index: 3, kind: input, shape index: {}]
  %s4 = inlined_call_operand.hbm [shape: f32[32,64], index: 4, kind: input, shape index: {}]
  %s5 = inlined_call_operand.vmem [shape: f32[1,64], index: 5, kind: input, shape index: {}]
  %s6 = inlined_call_operand.hbm [shape: f32[32,32], index: 6, kind: input, shape index: {}]
  %s7 = inlined_call_operand.vmem [shape: f32[1,32], index: 7, kind: input, shape index: {}]
  %s8 = inlined_call_operand.vmem [shape: f32[1,32], index: 8, kind: input, shape index: {}]
  %s9 = inlined_call_operand.vmem [shape: f32[1,32], index: 9, kind: input, shape index: {}]
  %s10 = inlined_call_operand.hbm [shape: f32[2,8,32], index: 10, kind: output, shape index: {}]
  %s11 = sld [smem:[#allocation0]]
  $region93: #{tpu_custom_call.1} parent=0
    _
  %s13 = ssub.s32 1, %s11
  %s14 = scalar_select 0, %s13, %s11
  $region1: #{tpu_custom_call.1} parent=0
    #allocation2 [shape = 'u8[16384]{0}', space=vmem, size = 0x4000, scoped, tag = 'input window, operand 0']
    #allocation3 [shape = 's32[2]{0}', space=sflag, size = 0x8, scoped, tag = 'scoped memory for tpu_custom_call.1']
    #allocation4 [shape = 's32[2]{0}', space=sflag, size = 0x8, scoped, tag = 'scoped memory for tpu_custom_call.1']
    #allocation5 [shape = 'u8[8192]{0}', space=vmem, size = 0x2000, scoped, tag = 'input window, operand 1']
    #allocation6 [shape = 's32[2]{0}', space=sflag, size = 0x8, scoped, tag = 'scoped memory for tpu_custom_call.1']
    #allocation7 [shape = 'u8[16384]{0}', space=vmem, size = 0x4000, scoped, tag = 'input window, operand 2, single buffered']
    #allocation8 [shape = 'u8[16384]{0}', space=vmem, size = 0x4000, scoped, tag = 'input window, operand 4, single buffered']
    #allocation9 [shape = 's32[1]{0}', space=sflag, size = 0x4, scoped, tag = 'scoped memory for tpu_custom_call.1']
    #allocation10 [shape = 'u8[16384]{0}', space=vmem, size = 0x4000, scoped, tag = 'input window, operand 6, single buffered']
    #allocation11 [shape = 'u8[8192]{0}', space=vmem, size = 0x2000, scoped, tag = 'output window, operand 0']
    %15 = vsyncpa [#allocation3], 0
    %s16 = scalar_lea.sflag [#allocation3], 1
    %17 = vsyncpa %s16, 0
    %18 = vsyncpa [#allocation6], 0
    %s19 = scalar_lea.sflag [#allocation6], 1
    %20 = vsyncpa %s19, 0
    %21 = vsyncpa [#allocation9], 0
    %22 = vsyncpa [#allocation4], 0
    %s23 = scalar_lea.sflag [#allocation4], 1
    %24 = vsyncpa %s23, 0
    loop: start=0, step=1, limit=4
    $region2: #{tpu_custom_call.1} parent=1 // loop_pre_header
      _
    $region3: #{tpu_custom_call.1} parent=1 // loop_header
      %s26 = sphi 0, %s30
      %p27 = scmp.ge.s32.totalorder %s26, 4
      %s36 = sphi 0, %s38
      %s39 = sphi 0, %s36
      %s40 = sphi 0, %s39
      %s56 = sphi 0, %s40
      %s62 = sphi 0, %s64
      %s65 = sphi 0, %s62
      %s66 = sphi 0, %s65
      %s82 = sphi 0, %s66
      %s86 = sphi 0, %s86
      %s88 = sphi 0, %s86
      %s89 = sphi 0, %s88
      %s103 = sphi 0, %s89
      %s107 = sphi 0, %s107
      %s109 = sphi 0, %s107
      %s110 = sphi 0, %s109
      %s124 = sphi 0, %s110
      %s128 = sphi 0, %s128
      %s130 = sphi 0, %s128
      %s131 = sphi 0, %s130
      %s145 = sphi 0, %s131
      %s149 = sphi 0, %s149
      %s151 = sphi 0, %s149
      %s152 = sphi 0, %s151
      %s166 = sphi 0, %s152
      %s170 = sphi 0, %s170
      %s172 = sphi 0, %s170
      %s173 = sphi 0, %s172
      %s187 = sphi 0, %s173
      %s191 = sphi 0, %s191
      %s193 = sphi 0, %s191
      %s194 = sphi 0, %s193
      %s208 = sphi 0, %s194
      %s212 = sphi 0, %s212
      %s214 = sphi 0, %s212
      %s215 = sphi 0, %s214
      %s229 = sphi 0, %s215
      %s233 = sphi 0, %s233
      %s235 = sphi 0, %s233
      %s236 = sphi 0, %s235
      %s250 = sphi 0, %s236
      %s256 = sphi 0, %s258
      %s259 = sphi 0, %s256
      %s260 = sphi 0, %s259
      %s276 = sphi 0, %s260
    $region4: #{tpu_custom_call.1} parent=1 // loop_header_branch
      %29 = sbr.rel (%p27) target = $region8
    $region5: #{tpu_custom_call.1} parent=1 // loop_body
      %s31 = ssub.s32 %s26, 1
      %s32 = ssub.s32 %s26, 2
      %s33 = sadd.s32 %s26, 1
      %s34 = ssub.s32 %s26, %s33
      %p35 = scmp.eq.s32.totalorder %s34, 0
      %s37 = sadd.s32 %s36, 1
      %s38 = scalar_select %p35, %s36, %s37
      %p41 = pneg %p35
      %p42 = scmp.eq.s32.totalorder %s26, 1
      %p43 = por %p41, %p42
      %p44 = scmp.ne.s32.totalorder %s36, %s39
      %p45 = scmp.eq.s32.totalorder %s26, 0
      %p46 = por %p44, %p45
      %p47 = scmp.ne.s32.totalorder %s36, %s39
      %p48 = scmp.eq.s32.totalorder %s31, 1
      %p49 = por %p47, %p48
      %p50 = scmp.ne.s32.totalorder %s39, %s40
      %p51 = scmp.eq.s32.totalorder %s31, 0
      %p52 = por %p50, %p51
      %p53 = scmp.ne.s32.totalorder %s39, %s40
      %p54 = scmp.eq.s32.totalorder %s32, 1
      %p55 = por %p53, %p54
      %p57 = scmp.ne.s32.totalorder %s40, %s56
      %p58 = scmp.eq.s32.totalorder %s32, 0
      %p59 = por %p57, %p58
      %s60 = ssub.s32 %s26, %s33
      %p61 = scmp.eq.s32.totalorder %s60, 0
      %s63 = sadd.s32 %s62, 1
      %s64 = scalar_select %p61, %s62, %s63
      %p67 = pneg %p61
      %p68 = scmp.eq.s32.totalorder %s26, 1
      %p69 = por %p67, %p68
      %p70 = scmp.ne.s32.totalorder %s62, %s65
      %p71 = scmp.eq.s32.totalorder %s26, 0
      %p72 = por %p70, %p71
      %p73 = scmp.ne.s32.totalorder %s62, %s65
      %p74 = scmp.eq.s32.totalorder %s31, 1
      %p75 = por %p73, %p74
      %p76 = scmp.ne.s32.totalorder %s65, %s66
      %p77 = scmp.eq.s32.totalorder %s31, 0
      %p78 = por %p76, %p77
      %p79 = scmp.ne.s32.totalorder %s65, %s66
      %p80 = scmp.eq.s32.totalorder %s32, 1
      %p81 = por %p79, %p80
      %p83 = scmp.ne.s32.totalorder %s66, %s82
      %p84 = scmp.eq.s32.totalorder %s32, 0
      %p85 = por %p83, %p84
      %s87 = sadd.s32 %s86, 1
      %p90 = scmp.eq.s32.totalorder %s26, 1
      %p91 = scmp.ne.s32.totalorder %s86, %s88
      %p92 = scmp.eq.s32.totalorder %s26, 0
      %p93 = por %p91, %p92
      %p94 = scmp.ne.s32.totalorder %s86, %s88
      %p95 = scmp.eq.s32.totalorder %s31, 1
      %p96 = por %p94, %p95
      %p97 = scmp.ne.s32.totalorder %s88, %s89
      %p98 = scmp.eq.s32.totalorder %s31, 0
      %p99 = por %p97, %p98
      %p100 = scmp.ne.s32.totalorder %s88, %s89
      %p101 = scmp.eq.s32.totalorder %s32, 1
      %p102 = por %p100, %p101
      %p104 = scmp.ne.s32.totalorder %s89, %s103
      %p105 = scmp.eq.s32.totalorder %s32, 0
      %p106 = por %p104, %p105
      %s108 = sadd.s32 %s107, 1
      %p111 = scmp.eq.s32.totalorder %s26, 1
      %p112 = scmp.ne.s32.totalorder %s107, %s109
      %p113 = scmp.eq.s32.totalorder %s26, 0
      %p114 = por %p112, %p113
      %p115 = scmp.ne.s32.totalorder %s107, %s109
      %p116 = scmp.eq.s32.totalorder %s31, 1
      %p117 = por %p115, %p116
      %p118 = scmp.ne.s32.totalorder %s109, %s110
      %p119 = scmp.eq.s32.totalorder %s31, 0
      %p120 = por %p118, %p119
      %p121 = scmp.ne.s32.totalorder %s109, %s110
      %p122 = scmp.eq.s32.totalorder %s32, 1
      %p123 = por %p121, %p122
      %p125 = scmp.ne.s32.totalorder %s110, %s124
      %p126 = scmp.eq.s32.totalorder %s32, 0
      %p127 = por %p125, %p126
      %s129 = sadd.s32 %s128, 1
      %p132 = scmp.eq.s32.totalorder %s26, 1
      %p133 = scmp.ne.s32.totalorder %s128, %s130
      %p134 = scmp.eq.s32.totalorder %s26, 0
      %p135 = por %p133, %p134
      %p136 = scmp.ne.s32.totalorder %s128, %s130
      %p137 = scmp.eq.s32.totalorder %s31, 1
      %p138 = por %p136, %p137
      %p139 = scmp.ne.s32.totalorder %s130, %s131
      %p140 = scmp.eq.s32.totalorder %s31, 0
      %p141 = por %p139, %p140
      %p142 = scmp.ne.s32.totalorder %s130, %s131
      %p143 = scmp.eq.s32.totalorder %s32, 1
      %p144 = por %p142, %p143
      %p146 = scmp.ne.s32.totalorder %s131, %s145
      %p147 = scmp.eq.s32.totalorder %s32, 0
      %p148 = por %p146, %p147
      %s150 = sadd.s32 %s149, 1
      %p153 = scmp.eq.s32.totalorder %s26, 1
      %p154 = scmp.ne.s32.totalorder %s149, %s151
      %p155 = scmp.eq.s32.totalorder %s26, 0
      %p156 = por %p154, %p155
      %p157 = scmp.ne.s32.totalorder %s149, %s151
      %p158 = scmp.eq.s32.totalorder %s31, 1
      %p159 = por %p157, %p158
      %p160 = scmp.ne.s32.totalorder %s151, %s152
      %p161 = scmp.eq.s32.totalorder %s31, 0
      %p162 = por %p160, %p161
      %p163 = scmp.ne.s32.totalorder %s151, %s152
      %p164 = scmp.eq.s32.totalorder %s32, 1
      %p165 = por %p163, %p164
      %p167 = scmp.ne.s32.totalorder %s152, %s166
      %p168 = scmp.eq.s32.totalorder %s32, 0
      %p169 = por %p167, %p168
      %s171 = sadd.s32 %s170, 1
      %p174 = scmp.eq.s32.totalorder %s26, 1
      %p175 = scmp.ne.s32.totalorder %s170, %s172
      %p176 = scmp.eq.s32.totalorder %s26, 0
      %p177 = por %p175, %p176
      %p178 = scmp.ne.s32.totalorder %s170, %s172
      %p179 = scmp.eq.s32.totalorder %s31, 1
      %p180 = por %p178, %p179
      %p181 = scmp.ne.s32.totalorder %s172, %s173
      %p182 = scmp.eq.s32.totalorder %s31, 0
      %p183 = por %p181, %p182
      %p184 = scmp.ne.s32.totalorder %s172, %s173
      %p185 = scmp.eq.s32.totalorder %s32, 1
      %p186 = por %p184, %p185
      %p188 = scmp.ne.s32.totalorder %s173, %s187
      %p189 = scmp.eq.s32.totalorder %s32, 0
      %p190 = por %p188, %p189
      %s192 = sadd.s32 %s191, 1
      %p195 = scmp.eq.s32.totalorder %s26, 1
      %p196 = scmp.ne.s32.totalorder %s191, %s193
      %p197 = scmp.eq.s32.totalorder %s26, 0
      %p198 = por %p196, %p197
      %p199 = scmp.ne.s32.totalorder %s191, %s193
      %p200 = scmp.eq.s32.totalorder %s31, 1
      %p201 = por %p199, %p200
      %p202 = scmp.ne.s32.totalorder %s193, %s194
      %p203 = scmp.eq.s32.totalorder %s31, 0
      %p204 = por %p202, %p203
      %p205 = scmp.ne.s32.totalorder %s193, %s194
      %p206 = scmp.eq.s32.totalorder %s32, 1
      %p207 = por %p205, %p206
      %p209 = scmp.ne.s32.totalorder %s194, %s208
      %p210 = scmp.eq.s32.totalorder %s32, 0
      %p211 = por %p209, %p210
      %s213 = sadd.s32 %s212, 1
      %p216 = scmp.eq.s32.totalorder %s26, 1
      %p217 = scmp.ne.s32.totalorder %s212, %s214
      %p218 = scmp.eq.s32.totalorder %s26, 0
      %p219 = por %p217, %p218
      %p220 = scmp.ne.s32.totalorder %s212, %s214
      %p221 = scmp.eq.s32.totalorder %s31, 1
      %p222 = por %p220, %p221
      %p223 = scmp.ne.s32.totalorder %s214, %s215
      %p224 = scmp.eq.s32.totalorder %s31, 0
      %p225 = por %p223, %p224
      %p226 = scmp.ne.s32.totalorder %s214, %s215
      %p227 = scmp.eq.s32.totalorder %s32, 1
      %p228 = por %p226, %p227
      %p230 = scmp.ne.s32.totalorder %s215, %s229
      %p231 = scmp.eq.s32.totalorder %s32, 0
      %p232 = por %p230, %p231
      %s234 = sadd.s32 %s233, 1
      %p237 = scmp.eq.s32.totalorder %s26, 1
      %p238 = scmp.ne.s32.totalorder %s233, %s235
      %p239 = scmp.eq.s32.totalorder %s26, 0
      %p240 = por %p238, %p239
      %p241 = scmp.ne.s32.totalorder %s233, %s235
      %p242 = scmp.eq.s32.totalorder %s31, 1
      %p243 = por %p241, %p242
      %p244 = scmp.ne.s32.totalorder %s235, %s236
      %p245 = scmp.eq.s32.totalorder %s31, 0
      %p246 = por %p244, %p245
      %p247 = scmp.ne.s32.totalorder %s235, %s236
      %p248 = scmp.eq.s32.totalorder %s32, 1
      %p249 = por %p247, %p248
      %p251 = scmp.ne.s32.totalorder %s236, %s250
      %p252 = scmp.eq.s32.totalorder %s32, 0
      %p253 = por %p251, %p252
      %s254 = ssub.s32 %s26, %s33
      %p255 = scmp.eq.s32.totalorder %s254, 0
      %s257 = sadd.s32 %s256, 1
      %s258 = scalar_select %p255, %s256, %s257
      %p261 = pneg %p255
      %p262 = scmp.eq.s32.totalorder %s26, 1
      %p263 = por %p261, %p262
      %p264 = scmp.ne.s32.totalorder %s256, %s259
      %p265 = scmp.eq.s32.totalorder %s26, 0
      %p266 = por %p264, %p265
      %p267 = scmp.ne.s32.totalorder %s256, %s259
      %p268 = scmp.eq.s32.totalorder %s31, 1
      %p269 = por %p267, %p268
      %p270 = scmp.ne.s32.totalorder %s259, %s260
      %p271 = scmp.eq.s32.totalorder %s31, 0
      %p272 = por %p270, %p271
      %p273 = scmp.ne.s32.totalorder %s259, %s260
      %p274 = scmp.eq.s32.totalorder %s32, 1
      %p275 = por %p273, %p274
      %p277 = scmp.ne.s32.totalorder %s260, %s276
      %p278 = scmp.eq.s32.totalorder %s32, 0
      %p279 = por %p277, %p278
      %p280 = scmp.le.s32.totalorder 1, %s26
      %p281 = scmp.lt.s32.totalorder %s26, 3
      %p282 = pnand %p280, %p281
      %p283 = pneg %p282
      // Predicated region
      $region9: #{tpu_custom_call.1} parent=5 // pred_check
        _
      $region10: #{tpu_custom_call.1} parent=5 // pred_check_branch
        %285 = sbr.rel (%p282) target = $region12
      $region11: #{tpu_custom_call.1} parent=5 // pred_region
        %s286 = ssub.s32 %s26, 1
        // Predicated region
        $region13: #{tpu_custom_call.1} parent=11 // pred_check
          %p287 = pneg %p99
        $region14: #{tpu_custom_call.1} parent=11 // pred_check_branch
          %289 = sbr.rel (%p287) target = $region16
        $region15: #{tpu_custom_call.1} parent=11 // pred_region
          %s291 = ssub.s32 512, 512
          %292 = vsyncadd [#allocation6], %s291
          %s293 = sshll.u32 [#allocation7], 4
          %s294 = int_to_ptr.vmem [resolvable:$true] %s293
          %299 = dma.hbm_to_vmem [thread:$0]  %s2, 512, %s294, [#allocation6], 128, 128, 8
        $region16: #{tpu_custom_call.1} parent=11 // pred_fallthru
          _
        // Predicated region
        $region17: #{tpu_custom_call.1} parent=11 // pred_check
          %p300 = pneg %p120
        $region18: #{tpu_custom_call.1} parent=11 // pred_check_branch
          %302 = sbr.rel (%p300) target = $region20
        $region19: #{tpu_custom_call.1} parent=11 // pred_region
          _
        $region20: #{tpu_custom_call.1} parent=11 // pred_fallthru
          _
        // Predicated region
        $region21: #{tpu_custom_call.1} parent=11 // pred_check
          %p303 = pneg %p141
        $region22: #{tpu_custom_call.1} parent=11 // pred_check_branch
          %305 = sbr.rel (%p303) target = $region24
        $region23: #{tpu_custom_call.1} parent=11 // pred_region
          %s307 = ssub.s32 512, 512
          %308 = vsyncadd [#allocation9], %s307
          %s309 = sshll.u32 [#allocation8], 4
          %s310 = int_to_ptr.vmem [resolvable:$true] %s309
          %315 = dma.hbm_to_vmem [thread:$0]  %s4, 512, %s310, [#allocation9], 128, 128, 8
        $region24: #{tpu_custom_call.1} parent=11 // pred_fallthru
          _
        // Predicated region
        $region25: #{tpu_custom_call.1} parent=11 // pred_check
          %p316 = pneg %p162
        $region26: #{tpu_custom_call.1} parent=11 // pred_check_branch
          %318 = sbr.rel (%p316) target = $region28
        $region27: #{tpu_custom_call.1} parent=11 // pred_region
          _
        $region28: #{tpu_custom_call.1} parent=11 // pred_fallthru
          _
        // Predicated region
        $region29: #{tpu_custom_call.1} parent=11 // pred_check
          %p319 = pneg %p183
        $region30: #{tpu_custom_call.1} parent=11 // pred_check_branch
          %321 = sbr.rel (%p319) target = $region32
        $region31: #{tpu_custom_call.1} parent=11 // pred_region
          %s323 = ssub.s32 512, 512
          %324 = vsyncadd [#allocation9], %s323
          %s325 = sshll.u32 [#allocation10], 4
          %s326 = int_to_ptr.vmem [resolvable:$true] %s325
          %331 = dma.hbm_to_vmem [thread:$0]  %s6, 512, %s326, [#allocation9], 128, 128, 8
        $region32: #{tpu_custom_call.1} parent=11 // pred_fallthru
          _
        // Predicated region
        $region33: #{tpu_custom_call.1} parent=11 // pred_check
          %p332 = pneg %p204
        $region34: #{tpu_custom_call.1} parent=11 // pred_check_branch
          %334 = sbr.rel (%p332) target = $region36
        $region35: #{tpu_custom_call.1} parent=11 // pred_region
          _
        $region36: #{tpu_custom_call.1} parent=11 // pred_fallthru
          _
        // Predicated region
        $region37: #{tpu_custom_call.1} parent=11 // pred_check
          %p335 = pneg %p225
        $region38: #{tpu_custom_call.1} parent=11 // pred_check_branch
          %337 = sbr.rel (%p335) target = $region40
        $region39: #{tpu_custom_call.1} parent=11 // pred_region
          _
        $region40: #{tpu_custom_call.1} parent=11 // pred_fallthru
          _
        // Predicated region
        $region41: #{tpu_custom_call.1} parent=11 // pred_check
          %p338 = pneg %p246
        $region42: #{tpu_custom_call.1} parent=11 // pred_check_branch
          %340 = sbr.rel (%p338) target = $region44
        $region43: #{tpu_custom_call.1} parent=11 // pred_region
          _
        $region44: #{tpu_custom_call.1} parent=11 // pred_fallthru
          _
      $region12: #{tpu_custom_call.1} parent=5 // pred_fallthru
        _
      %p341 = scmp.lt.s32.totalorder %s26, 2
      // Predicated region
      $region45: #{tpu_custom_call.1} parent=5 // pred_check
        %p342 = pneg %p341
      $region46: #{tpu_custom_call.1} parent=5 // pred_check_branch
        %344 = sbr.rel (%p342) target = $region48
      $region47: #{tpu_custom_call.1} parent=5 // pred_region
        // Predicated region
        $region49: #{tpu_custom_call.1} parent=47 // pred_check
          %p345 = pneg %p46
        $region50: #{tpu_custom_call.1} parent=47 // pred_check_branch
          %347 = sbr.rel (%p345) target = $region52
        $region51: #{tpu_custom_call.1} parent=47 // pred_region
          %s348 = sand.u32 %s36, 1
          %s349 = scalar_lea.sflag [#allocation3], %s348
          %s350 = sand.u32 %s36, 1
          %s351 = smul.addr %s350, 16
          %s352 = scalar_lea.vmem [#allocation2], %s351
          %s354 = ssub.s32 256, 256
          %355 = vsyncadd %s349, %s354
          %s356 = smul.addr %s26, 2
          %s357 = smul.addr %s356, 128
          %s358 = scalar_lea.hbm %s0, %s357
          %s359 = sshll.u32 %s352, 4
          %s360 = int_to_ptr.vmem [resolvable:$true] %s359
          %365 = dma.hbm_to_vmem [thread:$0]  %s358, 256, %s360, %s349, 128, 128, 8
        $region52: #{tpu_custom_call.1} parent=47 // pred_fallthru
          _
        // Predicated region
        $region53: #{tpu_custom_call.1} parent=47 // pred_check
          %p366 = pneg %p72
        $region54: #{tpu_custom_call.1} parent=47 // pred_check_branch
          %368 = sbr.rel (%p366) target = $region56
        $region55: #{tpu_custom_call.1} parent=47 // pred_region
          %s369 = sand.u32 %s26, 1
          %s370 = scalar_lea.sflag [#allocation6], %s369
          %s371 = sand.u32 %s62, 1
          %s372 = smul.addr %s371, 8
          %s373 = scalar_lea.vmem [#allocation5], %s372
          %s375 = ssub.s32 128, 128
          %376 = vsyncadd %s370, %s375
          %s377 = smul.addr %s26, 128
          %s378 = scalar_lea.hbm %s1, %s377
          %s380 = sshll.u32 %s373, 4
          %s381 = int_to_ptr.vmem [resolvable:$true] %s380
          %383 = dma.hbm_to_vmem [thread:$0]  %s378, 128, %s381, %s370
        $region56: #{tpu_custom_call.1} parent=47 // pred_fallthru
          _
      $region48: #{tpu_custom_call.1} parent=5 // pred_fallthru
        _
      %p384 = scmp.le.s32.totalorder 1, %s26
      %p385 = scmp.lt.s32.totalorder %s26, 3
      %p386 = pnand %p384, %p385
      %p387 = pneg %p386
      // Predicated region
      $region57: #{tpu_custom_call.1} parent=5 // pred_check
        _
      $region58: #{tpu_custom_call.1} parent=5 // pred_check_branch
        %389 = sbr.rel (%p386) target = $region60
      $region59: #{tpu_custom_call.1} parent=5 // pred_region
        %s390 = ssub.s32 %s26, 1
        %s391 = sand.u32 %s39, 1
        %s392 = scalar_lea.sflag [#allocation3], %s391
        %s393 = sand.u32 %s39, 1
        %s394 = smul.addr %s393, 16
        %s395 = scalar_lea.vmem [#allocation2], %s394
        // Predicated region
        $region61: #{tpu_custom_call.1} parent=59 // pred_check
          %p396 = pneg %p52
        $region62: #{tpu_custom_call.1} parent=59 // pred_check_branch
          %398 = sbr.rel (%p396) target = $region64
        $region63: #{tpu_custom_call.1} parent=59 // pred_region
          %399 = dma.done %s392, 256
        $region64: #{tpu_custom_call.1} parent=59 // pred_fallthru
          _
        %s400 = sand.u32 %s31, 1
        %s401 = scalar_lea.sflag [#allocation6], %s400
        %s402 = sand.u32 %s65, 1
        %s403 = smul.addr %s402, 8
        %s404 = scalar_lea.vmem [#allocation5], %s403
        // Predicated region
        $region65: #{tpu_custom_call.1} parent=59 // pred_check
          %p405 = pneg %p78
        $region66: #{tpu_custom_call.1} parent=59 // pred_check_branch
          %407 = sbr.rel (%p405) target = $region68
        $region67: #{tpu_custom_call.1} parent=59 // pred_region
          %408 = dma.done %s401, 128
        $region68: #{tpu_custom_call.1} parent=59 // pred_fallthru
          _
        // Predicated region
        $region69: #{tpu_custom_call.1} parent=59 // pred_check
          %p409 = pneg %p99
        $region70: #{tpu_custom_call.1} parent=59 // pred_check_branch
          %411 = sbr.rel (%p409) target = $region72
        $region71: #{tpu_custom_call.1} parent=59 // pred_region
          %412 = dma.done [#allocation6], 512
        $region72: #{tpu_custom_call.1} parent=59 // pred_fallthru
          _
        // Predicated region
        $region73: #{tpu_custom_call.1} parent=59 // pred_check
          %p413 = pneg %p141
        $region74: #{tpu_custom_call.1} parent=59 // pred_check_branch
          %415 = sbr.rel (%p413) target = $region76
        $region75: #{tpu_custom_call.1} parent=59 // pred_region
          %416 = dma.done [#allocation9], 512
        $region76: #{tpu_custom_call.1} parent=59 // pred_fallthru
          _
        // Predicated region
        $region77: #{tpu_custom_call.1} parent=59 // pred_check
          %p417 = pneg %p183
        $region78: #{tpu_custom_call.1} parent=59 // pred_check_branch
          %419 = sbr.rel (%p417) target = $region80
        $region79: #{tpu_custom_call.1} parent=59 // pred_region
          %420 = dma.done [#allocation9], 512
        $region80: #{tpu_custom_call.1} parent=59 // pred_fallthru
          _
        %s421 = sand.u32 %s39, 1
        %s422 = scalar_lea.sflag [#allocation3], %s421
        %s423 = sand.u32 %s39, 1
        %s424 = smul.addr %s423, 16
        %s425 = scalar_lea.vmem [#allocation2], %s424
        %p426 = pneg %p52
        %p427 = pneg %p49
        %s428 = sand.u32 %s31, 1
        %s429 = scalar_lea.sflag [#allocation6], %s428
        %s430 = sand.u32 %s65, 1
        %s431 = smul.addr %s430, 8
        %s432 = scalar_lea.vmem [#allocation5], %s431
        %p433 = pneg %p78
        %p434 = pneg %p75
        %p435 = pneg %p99
        %p436 = pneg %p96
        %p437 = pneg %p120
        %p438 = pneg %p117
        %p439 = pneg %p141
        %p440 = pneg %p138
        %p441 = pneg %p162
        %p442 = pneg %p159
        %p443 = pneg %p183
        %p444 = pneg %p180
        %p445 = pneg %p204
        %p446 = pneg %p201
        %p447 = pneg %p225
        %p448 = pneg %p222
        %p449 = pneg %p246
        %p450 = pneg %p243
        %p451 = pneg %p272
        %p452 = pneg %p269
        %s453 = sand.u32 %s259, 1
        %s454 = scalar_lea.sflag [#allocation4], %s453
        %s455 = sand.u32 %s259, 1
        %s456 = smul.addr %s455, 8
        %s457 = scalar_lea.vmem [#allocation11], %s456
        %v458 = vld [vmem:[%s404] sm:$0xff]
        %v459 = vld [vmem:[%s395] sm:$0xff]
        %v460 = vld [vmem:[%s395 + $0x8] sm:$0xff]
        %v461 = vld [vmem:[#allocation7] sm:$0xff]
        %v462 = vld [vmem:[#allocation7 + $0x8] sm:$0xff]
        %v463 = vld [vmem:[#allocation7 + $0x10] sm:$0xff]
        %v464 = vld [vmem:[#allocation7 + $0x18] sm:$0xff]
        %v465 = vld [vmem:[%s3] sm:$0x1]
        %v467 = vlaneseq
        %v468 = vshrl.u32 %v467, 7
        %v469 = vsub.s32 0, %v468
        %v470 = vrot.slane %v465, %v469
        %vm472 = vcmask 261120
        %v474 = vsel %vm472, %v458, 0
        %476 = vmatprep.subr.mxu0 0.0
        %477 = vmatpush1.msra.mxu0 0.0
        %478 = vmatprep.subr.mxu0 0.0
        %479 = vmatpush1.msra.mxu0 0.0
        %480 = vmatprep.subr.mxu0 0.0
        %481 = vmatpush1.msra.mxu0 0.0
        %482 = vmatprep.subr.mxu0 0.0
        %483 = vmatpush1.msra.mxu0 0.0
        %484 = vmatprep.subr.mxu0 0.0
        %485 = vmatpush1.msra.mxu0 0.0
        %486 = vmatprep.subr.mxu0 0.0
        %487 = vmatpush1.msra.mxu0 0.0
        %488 = vmatprep.subr.mxu0 0.0
        %489 = vmatpush1.msra.mxu0 0.0
        %490 = vmatprep.subr.mxu0 0.0
        %491 = vmatpush1.msra.mxu0 0.0
        %492 = vmatprep.subr.mxu0 0.0
        %493 = vmatpush1.msra.mxu0 0.0
        %494 = vmatprep.subr.mxu0 0.0
        %495 = vmatpush1.msra.mxu0 0.0
        %496 = vmatprep.subr.mxu0 0.0
        %497 = vmatpush1.msra.mxu0 0.0
        %498 = vmatprep.subr.mxu0 0.0
        %499 = vmatpush1.msra.mxu0 0.0
        %500 = vmatprep.subr.mxu0 0.0
        %501 = vmatpush1.msra.mxu0 %v464
        %502 = vmatprep.subr.mxu0 0.0
        %503 = vmatpush1.msra.mxu0 %v463
        %504 = vmatprep.subr.mxu0 0.0
        %505 = vmatpush1.msra.mxu0 %v462
        %506 = vmatprep.subr.mxu0 0.0
        %507 = vmatpush1.msra.mxu0 %v461
        %508 = vmatprep.subr.mxu0 0.0
        %509 = vmatpush2.msra.mxu0 0.0
        %510 = vmatprep.subr.mxu0 0.0
        %511 = vmatpush2.msra.mxu0 0.0
        %512 = vmatprep.subr.mxu0 0.0
        %513 = vmatpush2.msra.mxu0 0.0
        %514 = vmatprep.subr.mxu0 0.0
        %515 = vmatpush2.msra.mxu0 0.0
        %516 = vmatprep.subr.mxu0 0.0
        %517 = vmatpush2.msra.mxu0 0.0
        %518 = vmatprep.subr.mxu0 0.0
        %519 = vmatpush2.msra.mxu0 0.0
        %520 = vmatprep.subr.mxu0 0.0
        %521 = vmatpush2.msra.mxu0 0.0
        %522 = vmatprep.subr.mxu0 0.0
        %523 = vmatpush2.msra.mxu0 0.0
        %524 = vmatprep.subr.mxu0 0.0
        %525 = vmatpush2.msra.mxu0 0.0
        %526 = vmatprep.subr.mxu0 0.0
        %527 = vmatpush2.msra.mxu0 0.0
        %528 = vmatprep.subr.mxu0 0.0
        %529 = vmatpush2.msra.mxu0 0.0
        %530 = vmatprep.subr.mxu0 0.0
        %531 = vmatpush2.msra.mxu0 0.0
        %532 = vmatprep.subr.mxu0 0.0
        %533 = vmatpush2.msra.mxu0 0.0
        %534 = vmatprep.subr.mxu0 0.0
        %535 = vmatpush2.msra.mxu0 0.0
        %536 = vmatprep.subr.mxu0 0.0
        %537 = vmatpush2.msra.mxu0 0.0
        %538 = vmatprep.subr.mxu0 0.0
        %539 = vmatpush2.msra.mxu0 0.0
        %540 = vmatprep.mubr.f32.mxu0 0.0
        %541 = vmatmul.mubr.f32.gmra.mxu0 %v474
        %v542 = vpop.f32.mrf.mxu0
        %v543 = vadd.f32 %v470, %v542
        %v544 = vpop.f32.mrf.mxu0
        %545 = vdwg.mxu0
        %v546 = vld [vmem:[#allocation8] sm:$0xff]
        %v547 = vld [vmem:[#allocation8 + $0x8] sm:$0xff]
        %v548 = vld [vmem:[#allocation8 + $0x10] sm:$0xff]
        %v549 = vld [vmem:[#allocation8 + $0x18] sm:$0xff]
        %v550 = vld [vmem:[%s5] sm:$0x1]
        %v552 = vlaneseq
        %v553 = vshrl.u32 %v552, 7
        %v554 = vsub.s32 0, %v553
        %v555 = vrot.slane %v550, %v554
        %v558 = vsel %vm472, %v459, 0
        %v561 = vsel %vm472, %v460, 0
        %563 = vmatprep.subr.mxu0 0.0
        %564 = vmatpush1.msra.mxu0 0.0
        %565 = vmatprep.subr.mxu0 0.0
        %566 = vmatpush1.msra.mxu0 0.0
        %567 = vmatprep.subr.mxu0 0.0
        %568 = vmatpush1.msra.mxu0 0.0
        %569 = vmatprep.subr.mxu0 0.0
        %570 = vmatpush1.msra.mxu0 0.0
        %571 = vmatprep.subr.mxu0 0.0
        %572 = vmatpush1.msra.mxu0 0.0
        %573 = vmatprep.subr.mxu0 0.0
        %574 = vmatpush1.msra.mxu0 0.0
        %575 = vmatprep.subr.mxu0 0.0
        %576 = vmatpush1.msra.mxu0 0.0
        %577 = vmatprep.subr.mxu0 0.0
        %578 = vmatpush1.msra.mxu0 0.0
        %579 = vmatprep.subr.mxu0 0.0
        %580 = vmatpush1.msra.mxu0 0.0
        %581 = vmatprep.subr.mxu0 0.0
        %582 = vmatpush1.msra.mxu0 0.0
        %583 = vmatprep.subr.mxu0 0.0
        %584 = vmatpush1.msra.mxu0 0.0
        %585 = vmatprep.subr.mxu0 0.0
        %586 = vmatpush1.msra.mxu0 0.0
        %587 = vmatprep.subr.mxu0 0.0
        %588 = vmatpush1.msra.mxu0 %v549
        %589 = vmatprep.subr.mxu0 0.0
        %590 = vmatpush1.msra.mxu0 %v548
        %591 = vmatprep.subr.mxu0 0.0
        %592 = vmatpush1.msra.mxu0 %v547
        %593 = vmatprep.subr.mxu0 0.0
        %594 = vmatpush1.msra.mxu0 %v546
        %595 = vmatprep.subr.mxu0 0.0
        %596 = vmatpush2.msra.mxu0 0.0
        %597 = vmatprep.subr.mxu0 0.0
        %598 = vmatpush2.msra.mxu0 0.0
        %599 = vmatprep.subr.mxu0 0.0
        %600 = vmatpush2.msra.mxu0 0.0
        %601 = vmatprep.subr.mxu0 0.0
        %602 = vmatpush2.msra.mxu0 0.0
        %603 = vmatprep.subr.mxu0 0.0
        %604 = vmatpush2.msra.mxu0 0.0
        %605 = vmatprep.subr.mxu0 0.0
        %606 = vmatpush2.msra.mxu0 0.0
        %607 = vmatprep.subr.mxu0 0.0
        %608 = vmatpush2.msra.mxu0 0.0
        %609 = vmatprep.subr.mxu0 0.0
        %610 = vmatpush2.msra.mxu0 0.0
        %611 = vmatprep.subr.mxu0 0.0
        %612 = vmatpush2.msra.mxu0 0.0
        %613 = vmatprep.subr.mxu0 0.0
        %614 = vmatpush2.msra.mxu0 0.0
        %615 = vmatprep.subr.mxu0 0.0
        %616 = vmatpush2.msra.mxu0 0.0
        %617 = vmatprep.subr.mxu0 0.0
        %618 = vmatpush2.msra.mxu0 0.0
        %619 = vmatprep.subr.mxu0 0.0
        %620 = vmatpush2.msra.mxu0 0.0
        %621 = vmatprep.subr.mxu0 0.0
        %622 = vmatpush2.msra.mxu0 0.0
        %623 = vmatprep.subr.mxu0 0.0
        %624 = vmatpush2.msra.mxu0 0.0
        %625 = vmatprep.subr.mxu0 0.0
        %626 = vmatpush2.msra.mxu0 0.0
        %627 = vmatprep.mubr.f32.mxu0 0.0
        %628 = vmatmul.mubr.f32.gmra.mxu0 %v558
        %v629 = vpop.f32.mrf.mxu0
        %v630 = vadd.f32 %v555, %v629
        %v631 = vpop.f32.mrf.mxu0
        %632 = vmatprep.mubr.f32.mxu0 0.0
        %633 = vmatmul.mubr.f32.gmra.mxu0 %v561
        %v634 = vpop.f32.mrf.mxu0
        %v635 = vadd.f32 %v555, %v634
        %v636 = vpop.f32.mrf.mxu0
        %637 = vdwg.mxu0
        %v639 = vsel %vm472, %v543, 0
        %v642 = vsel %vm472, %v630, 0
        %v645 = vsel %vm472, %v635, 0
        %647 = vmatprep.subr.mxu0 0.0
        %648 = vmatpush1.xpose.msra.mxu0 0.0
        %649 = vmatprep.subr.mxu0 0.0
        %650 = vmatpush1.xpose.msra.mxu0 0.0
        %651 = vmatprep.subr.mxu0 0.0
        %652 = vmatpush1.xpose.msra.mxu0 0.0
        %653 = vmatprep.subr.mxu0 0.0
        %654 = vmatpush1.xpose.msra.mxu0 0.0
        %655 = vmatprep.subr.mxu0 0.0
        %656 = vmatpush1.xpose.msra.mxu0 0.0
        %657 = vmatprep.subr.mxu0 0.0
        %658 = vmatpush1.xpose.msra.mxu0 0.0
        %659 = vmatprep.subr.mxu0 0.0
        %660 = vmatpush1.xpose.msra.mxu0 0.0
        %661 = vmatprep.subr.mxu0 0.0
        %662 = vmatpush1.xpose.msra.mxu0 0.0
        %663 = vmatprep.subr.mxu0 0.0
        %664 = vmatpush1.xpose.msra.mxu0 0.0
        %665 = vmatprep.subr.mxu0 0.0
        %666 = vmatpush1.xpose.msra.mxu0 0.0
        %667 = vmatprep.subr.mxu0 0.0
        %668 = vmatpush1.xpose.msra.mxu0 0.0
        %669 = vmatprep.subr.mxu0 0.0
        %670 = vmatpush1.xpose.msra.mxu0 0.0
        %671 = vmatprep.subr.mxu0 0.0
        %672 = vmatpush1.xpose.msra.mxu0 0.0
        %673 = vmatprep.subr.mxu0 0.0
        %674 = vmatpush1.xpose.msra.mxu0 0.0
        %675 = vmatprep.subr.mxu0 0.0
        %676 = vmatpush1.xpose.msra.mxu0 %v645
        %677 = vmatprep.subr.mxu0 0.0
        %678 = vmatpush1.xpose.msra.mxu0 %v642
        %679 = vmatprep.subr.mxu0 0.0
        %680 = vmatpush2.xpose.msra.mxu0 0.0
        %681 = vmatprep.subr.mxu0 0.0
        %682 = vmatpush2.xpose.msra.mxu0 0.0
        %683 = vmatprep.subr.mxu0 0.0
        %684 = vmatpush2.xpose.msra.mxu0 0.0
        %685 = vmatprep.subr.mxu0 0.0
        %686 = vmatpush2.xpose.msra.mxu0 0.0
        %687 = vmatprep.subr.mxu0 0.0
        %688 = vmatpush2.xpose.msra.mxu0 0.0
        %689 = vmatprep.subr.mxu0 0.0
        %690 = vmatpush2.xpose.msra.mxu0 0.0
        %691 = vmatprep.subr.mxu0 0.0
        %692 = vmatpush2.xpose.msra.mxu0 0.0
        %693 = vmatprep.subr.mxu0 0.0
        %694 = vmatpush2.xpose.msra.mxu0 0.0
        %695 = vmatprep.subr.mxu0 0.0
        %696 = vmatpush2.xpose.msra.mxu0 0.0
        %697 = vmatprep.subr.mxu0 0.0
        %698 = vmatpush2.xpose.msra.mxu0 0.0
        %699 = vmatprep.subr.mxu0 0.0
        %700 = vmatpush2.xpose.msra.mxu0 0.0
        %701 = vmatprep.subr.mxu0 0.0
        %702 = vmatpush2.xpose.msra.mxu0 0.0
        %703 = vmatprep.subr.mxu0 0.0
        %704 = vmatpush2.xpose.msra.mxu0 0.0
        %705 = vmatprep.subr.mxu0 0.0
        %706 = vmatpush2.xpose.msra.mxu0 0.0
        %707 = vmatprep.subr.mxu0 0.0
        %708 = vmatpush2.xpose.msra.mxu0 0.0
        %709 = vmatprep.subr.mxu0 0.0
        %710 = vmatpush2.xpose.msra.mxu0 0.0
        %711 = vmatprep.mubr.f32.mxu0 0.0
        %712 = vmatmul.mubr.f32.gmra.mxu0 %v639
        %v713 = vpop.f32.mrf.mxu0
        %v714 = vadd.f32 0.0, %v713
        %v715 = vpop.f32.mrf.mxu0
        %716 = vdwg.mxu0
        %v717 = vmul.f32 %v714, 0.17677669
        %v718 = vadd.f32 %v717, 1.0
        %vm719 = vcmask 130048
        %v720 = vsel %vm719, %v718, -inf
        %721 = vmax.xlane.f32.xlu0 %v720
        %v722 = vpop.xlane.xlu0 %721
        %v723 = vsub.f32 %v718, %v722
        %v724 = vmul.f32 %v723, 1.442695
        %v725 = vpow.pop %v724
        %v726 = vsel %vm719, %v725, 0.0
        %727 = vadd.xlane.f32.xlu0 %v726
        %v728 = vpop.xlane.xlu0 %727
        %v729 = vrcp.pop %v728
        %v730 = vmul.f32 %v725, %v729
        %731 = vrot.lane.b32.xlu0 %v630, 96
        %v732 = vpop.permute.xlu0 %731
        %733 = vrot.lane.b32.xlu0 %v635, 96
        %v734 = vpop.permute.xlu0 %733
        %v738 = vsel %vm719, %v730, 0
        %740 = vmatprep.subr.mxu0 0.0
        %741 = vmatpush1.msra.mxu0 0.0
        %742 = vmatprep.subr.mxu0 0.0
        %743 = vmatpush1.msra.mxu0 0.0
        %744 = vmatprep.subr.mxu0 0.0
        %745 = vmatpush1.msra.mxu0 0.0
        %746 = vmatprep.subr.mxu0 0.0
        %747 = vmatpush1.msra.mxu0 0.0
        %748 = vmatprep.subr.mxu0 0.0
        %749 = vmatpush1.msra.mxu0 0.0
        %750 = vmatprep.subr.mxu0 0.0
        %751 = vmatpush1.msra.mxu0 0.0
        %752 = vmatprep.subr.mxu0 0.0
        %753 = vmatpush1.msra.mxu0 0.0
        %754 = vmatprep.subr.mxu0 0.0
        %755 = vmatpush1.msra.mxu0 0.0
        %756 = vmatprep.subr.mxu0 0.0
        %757 = vmatpush1.msra.mxu0 0.0
        %758 = vmatprep.subr.mxu0 0.0
        %759 = vmatpush1.msra.mxu0 0.0
        %760 = vmatprep.subr.mxu0 0.0
        %761 = vmatpush1.msra.mxu0 0.0
        %762 = vmatprep.subr.mxu0 0.0
        %763 = vmatpush1.msra.mxu0 0.0
        %764 = vmatprep.subr.mxu0 0.0
        %765 = vmatpush1.msra.mxu0 0.0
        %766 = vmatprep.subr.mxu0 0.0
        %767 = vmatpush1.msra.mxu0 0.0
        %768 = vmatprep.subr.mxu0 0.0
        %769 = vmatpush1.msra.mxu0 %v734
        %770 = vmatprep.subr.mxu0 0.0
        %771 = vmatpush1.msra.mxu0 %v732
        %772 = vmatprep.subr.mxu0 0.0
        %773 = vmatpush2.msra.mxu0 0.0
        %774 = vmatprep.subr.mxu0 0.0
        %775 = vmatpush2.msra.mxu0 0.0
        %776 = vmatprep.subr.mxu0 0.0
        %777 = vmatpush2.msra.mxu0 0.0
        %778 = vmatprep.subr.mxu0 0.0
        %779 = vmatpush2.msra.mxu0 0.0
        %780 = vmatprep.subr.mxu0 0.0
        %781 = vmatpush2.msra.mxu0 0.0
        %782 = vmatprep.subr.mxu0 0.0
        %783 = vmatpush2.msra.mxu0 0.0
        %784 = vmatprep.subr.mxu0 0.0
        %785 = vmatpush2.msra.mxu0 0.0
        %786 = vmatprep.subr.mxu0 0.0
        %787 = vmatpush2.msra.mxu0 0.0
        %788 = vmatprep.subr.mxu0 0.0
        %789 = vmatpush2.msra.mxu0 0.0
        %790 = vmatprep.subr.mxu0 0.0
        %791 = vmatpush2.msra.mxu0 0.0
        %792 = vmatprep.subr.mxu0 0.0
        %793 = vmatpush2.msra.mxu0 0.0
        %794 = vmatprep.subr.mxu0 0.0
        %795 = vmatpush2.msra.mxu0 0.0
        %796 = vmatprep.subr.mxu0 0.0
        %797 = vmatpush2.msra.mxu0 0.0
        %798 = vmatprep.subr.mxu0 0.0
        %799 = vmatpush2.msra.mxu0 0.0
        %800 = vmatprep.subr.mxu0 0.0
        %801 = vmatpush2.msra.mxu0 0.0
        %802 = vmatprep.subr.mxu0 0.0
        %803 = vmatpush2.msra.mxu0 0.0
        %804 = vmatprep.mubr.f32.mxu0 0.0
        %805 = vmatmul.mubr.f32.gmra.mxu0 %v738
        %v806 = vpop.f32.mrf.mxu0
        %v807 = vadd.f32 0.0, %v806
        %v808 = vpop.f32.mrf.mxu0
        %809 = vdwg.mxu0
        %v810 = vld [vmem:[#allocation10] sm:$0xff]
        %v811 = vld [vmem:[#allocation10 + $0x8] sm:$0xff]
        %v812 = vld [vmem:[#allocation10 + $0x10] sm:$0xff]
        %v813 = vld [vmem:[#allocation10 + $0x18] sm:$0xff]
        %v814 = vld [vmem:[%s7] sm:$0x1]
        %v816 = vlaneseq
        %v817 = vshrl.u32 %v816, 7
        %v818 = vsub.s32 0, %v817
        %v819 = vrot.slane %v814, %v818
        %v822 = vsel %vm472, %v807, 0
        %824 = vmatprep.subr.mxu0 0.0
        %825 = vmatpush1.msra.mxu0 0.0
        %826 = vmatprep.subr.mxu0 0.0
        %827 = vmatpush1.msra.mxu0 0.0
        %828 = vmatprep.subr.mxu0 0.0
        %829 = vmatpush1.msra.mxu0 0.0
        %830 = vmatprep.subr.mxu0 0.0
        %831 = vmatpush1.msra.mxu0 0.0
        %832 = vmatprep.subr.mxu0 0.0
        %833 = vmatpush1.msra.mxu0 0.0
        %834 = vmatprep.subr.mxu0 0.0
        %835 = vmatpush1.msra.mxu0 0.0
        %836 = vmatprep.subr.mxu0 0.0
        %837 = vmatpush1.msra.mxu0 0.0
        %838 = vmatprep.subr.mxu0 0.0
        %839 = vmatpush1.msra.mxu0 0.0
        %840 = vmatprep.subr.mxu0 0.0
        %841 = vmatpush1.msra.mxu0 0.0
        %842 = vmatprep.subr.mxu0 0.0
        %843 = vmatpush1.msra.mxu0 0.0
        %844 = vmatprep.subr.mxu0 0.0
        %845 = vmatpush1.msra.mxu0 0.0
        %846 = vmatprep.subr.mxu0 0.0
        %847 = vmatpush1.msra.mxu0 0.0
        %848 = vmatprep.subr.mxu0 0.0
        %849 = vmatpush1.msra.mxu0 %v813
        %850 = vmatprep.subr.mxu0 0.0
        %851 = vmatpush1.msra.mxu0 %v812
        %852 = vmatprep.subr.mxu0 0.0
        %853 = vmatpush1.msra.mxu0 %v811
        %854 = vmatprep.subr.mxu0 0.0
        %855 = vmatpush1.msra.mxu0 %v810
        %856 = vmatprep.subr.mxu0 0.0
        %857 = vmatpush2.msra.mxu0 0.0
        %858 = vmatprep.subr.mxu0 0.0
        %859 = vmatpush2.msra.mxu0 0.0
        %860 = vmatprep.subr.mxu0 0.0
        %861 = vmatpush2.msra.mxu0 0.0
        %862 = vmatprep.subr.mxu0 0.0
        %863 = vmatpush2.msra.mxu0 0.0
        %864 = vmatprep.subr.mxu0 0.0
        %865 = vmatpush2.msra.mxu0 0.0
        %866 = vmatprep.subr.mxu0 0.0
        %867 = vmatpush2.msra.mxu0 0.0
        %868 = vmatprep.subr.mxu0 0.0
        %869 = vmatpush2.msra.mxu0 0.0
        %870 = vmatprep.subr.mxu0 0.0
        %871 = vmatpush2.msra.mxu0 0.0
        %872 = vmatprep.subr.mxu0 0.0
        %873 = vmatpush2.msra.mxu0 0.0
        %874 = vmatprep.subr.mxu0 0.0
        %875 = vmatpush2.msra.mxu0 0.0
        %876 = vmatprep.subr.mxu0 0.0
        %877 = vmatpush2.msra.mxu0 0.0
        %878 = vmatprep.subr.mxu0 0.0
        %879 = vmatpush2.msra.mxu0 0.0
        %880 = vmatprep.subr.mxu0 0.0
        %881 = vmatpush2.msra.mxu0 0.0
        %882 = vmatprep.subr.mxu0 0.0
        %883 = vmatpush2.msra.mxu0 0.0
        %884 = vmatprep.subr.mxu0 0.0
        %885 = vmatpush2.msra.mxu0 0.0
        %886 = vmatprep.subr.mxu0 0.0
        %887 = vmatpush2.msra.mxu0 0.0
        %888 = vmatprep.mubr.f32.mxu0 0.0
        %889 = vmatmul.mubr.f32.gmra.mxu0 %v822
        %v890 = vpop.f32.mrf.mxu0
        %v891 = vadd.f32 %v819, %v890
        %v892 = vpop.f32.mrf.mxu0
        %893 = vdwg.mxu0
        %v894 = vadd.f32 %v891, %v458
        %v895 = vsel %vm472, %v894, 0.0
        %896 = vadd.xlane.f32.xlu0 %v895
        %v897 = vpop.xlane.xlu0 %896
        %v898 = vrcp.pop 32.0
        %v899 = vmul.f32 %v897, %v898
        %v900 = vsub.f32 %v894, %v899
        %v901 = vmul.f32 %v900, %v900
        %v902 = vsel %vm472, %v901, 0.0
        %903 = vadd.xlane.f32.xlu0 %v902
        %v904 = vpop.xlane.xlu0 %903
        %v905 = vmul.f32 %v904, %v898
        %v906 = vadd.f32 %v905, 1e-12
        %v907 = vrsqrt.pop %v906
        %v908 = vmul.f32 %v900, %v907
        %v909 = vld [vmem:[%s8] sm:$0x1]
        %v911 = vlaneseq
        %v912 = vshrl.u32 %v911, 7
        %v913 = vsub.s32 0, %v912
        %v914 = vrot.slane %v909, %v913
        %v916 = vmul.f32 %v908, %v914
        %v917 = vld [vmem:[%s9] sm:$0x1]
        %v919 = vlaneseq
        %v920 = vshrl.u32 %v919, 7
        %v921 = vsub.s32 0, %v920
        %v922 = vrot.slane %v917, %v921
        %v924 = vadd.f32 %v916, %v922
        %925 = vst.msk [vmem:[%s457] sm:$0xff] %vm472, %v924
        %s926 = sand.u32 %s259, 1
        %s927 = scalar_lea.sflag [#allocation4], %s926
        %s928 = sand.u32 %s259, 1
        %s929 = smul.addr %s928, 8
        %s930 = scalar_lea.vmem [#allocation11], %s929
        // Predicated region
        $region81: #{tpu_custom_call.1} parent=59 // pred_check
          %p931 = pneg %p269
        $region82: #{tpu_custom_call.1} parent=59 // pred_check_branch
          %933 = sbr.rel (%p931) target = $region84
        $region83: #{tpu_custom_call.1} parent=59 // pred_region
          %s935 = ssub.s32 128, 128
          %936 = vsyncadd %s927, %s935
          %s937 = smul.addr %s31, 128
          %s938 = scalar_lea.hbm %s10, %s937
          %s940 = sshll.u32 %s930, 4
          %s941 = int_to_ptr.vmem [resolvable:$true] %s940
          %943 = dma.vmem_to_hbm [thread:$0]  %s941, 128, %s938, %s927
        $region84: #{tpu_custom_call.1} parent=59 // pred_fallthru
          _
      $region60: #{tpu_custom_call.1} parent=5 // pred_fallthru
        _
      %p944 = scmp.le.s32.totalorder 2, %s26
      // Predicated region
      $region85: #{tpu_custom_call.1} parent=5 // pred_check
        %p945 = pneg %p944
      $region86: #{tpu_custom_call.1} parent=5 // pred_check_branch
        %947 = sbr.rel (%p945) target = $region88
      $region87: #{tpu_custom_call.1} parent=5 // pred_region
        %s948 = ssub.s32 %s26, 2
        // Predicated region
        $region89: #{tpu_custom_call.1} parent=87 // pred_check
          %p949 = pneg %p275
        $region90: #{tpu_custom_call.1} parent=87 // pred_check_branch
          %951 = sbr.rel (%p949) target = $region92
        $region91: #{tpu_custom_call.1} parent=87 // pred_region
          %s952 = sand.u32 %s260, 1
          %s953 = scalar_lea.sflag [#allocation4], %s952
          %s954 = sand.u32 %s260, 1
          %s955 = smul.addr %s954, 8
          %s956 = scalar_lea.vmem [#allocation11], %s955
          %957 = dma.done %s953, 128
        $region92: #{tpu_custom_call.1} parent=87 // pred_fallthru
          _
      $region88: #{tpu_custom_call.1} parent=5 // pred_fallthru
        _
    $region6: #{tpu_custom_call.1} parent=1 // loop_footer
      %s30 = sadd.s32 1, %s26
    $region7: #{tpu_custom_call.1} parent=1 // loop_footer_branch
      %25 = sbr.rel target = $region3
    $region8: #{tpu_custom_call.1} parent=1 // loop_exit
      _
    %958 = vsyncpa [#allocation3], 1
    %s959 = scalar_lea.sflag [#allocation3], 1
    %960 = vsyncpa %s959, 1
    %961 = vsyncpa [#allocation6], 1
    %s962 = scalar_lea.sflag [#allocation6], 1
    %963 = vsyncpa %s962, 1
    %964 = vsyncpa [#allocation9], 1
    %965 = vsyncpa [#allocation4], 1
    %s966 = scalar_lea.sflag [#allocation4], 1
    %967 = vsyncpa %s966, 1

</llo_original>
